<compile_context>
chip_gen: v5e
topology: v5e:2x2
jax: 0.10.0
libtpu: 0.0.40
codegen_flags: <defaults>
</compile_context>

<pallas_src>
import jax
import jax.numpy as jnp
from jax.experimental import pallas as pl
from jax.experimental.pallas import tpu as pltpu


def _net_kernel(x_ref, w_ref, b_ref, o_ref):
    # x_ref: (TM, in_dim) batch tile in native layout.
    # w_ref: (8, in_dim) folded weight (row 0 real, rows 1..7 zero padding).
    # b_ref: (1, 1) folded bias.  o_ref: (1, TM) lane-dense output row.
    xf = x_ref[...].astype(jnp.float32)            # torch: x.to(float32)

    # (8, in_dim) . (TM, in_dim)^T -> (8, TM): contract the feature axis of both
    # operands (NT dimension numbers, same form flash-attention uses for q @ k^T).
    # Row 0 of the result is the folded network's pre-activation for each sample.
    h = jax.lax.dot_general(
        w_ref[...], xf,
        dimension_numbers=(((1,), (1,)), ((), ())),
        preferred_element_type=jnp.float32)

    # Bias add + sigmoid in f32, store as a lane-dense (1, TM) row.
    o_ref[...] = jax.nn.sigmoid(h[0:1, :] + b_ref[...])


def _fold_params(params):
    """Compose the 6 affine layers (PyTorch (out, in) layout) into one affine map, in f32."""
    w_eff = params[0][0].astype(jnp.float32)       # (32, in_dim)
    b_eff = params[0][1].astype(jnp.float32)       # (32,)
    for w, b in params[1:]:
        wf = w.astype(jnp.float32)
        b_eff = wf @ b_eff + b.astype(jnp.float32)
        w_eff = wf @ w_eff
    return w_eff, b_eff                            # (1, in_dim), (1,)


def net_forward(x, params, *, tile_batch=8192):
    """x: (B, in_dim). params: list of (W, b) with W of shape (out, in) (PyTorch layout).
    Returns a (B,) float32 vector == torch sigmoid(Net(x)).view(-1)."""
    B, in_dim = x.shape

    # ---- fold the whole network into y = sigmoid(W_eff @ x + b_eff) (host-side, f32) ----
    w_eff, b_eff = _fold_params(params)
    # Pad the single output row to 8 rows so the MXU matmul has a well-shaped (8, K) lhs.
    w_pad = jnp.concatenate([w_eff, jnp.zeros((7, in_dim), jnp.float32)], axis=0)
    b2 = b_eff.reshape(1, 1)

    # ---- batch tile selection (native layout, no transpose / pad copies of x) ----
    if B <= 256:
        tm = B                                     # single full-extent tile (any B allowed)
    else:
        # 128-aligned tile, capped at tile_batch and at ~B/2 so there are >=2 grid
        # steps -> v7x megacore gets both TensorCores busy via "parallel" semantics.
        half_aligned = ((((B + 1) // 2) + 127) // 128) * 128
        tm = max(128, min(int(tile_batch), half_aligned))
    grid = (pl.cdiv(B, tm),)

    cost = pl.CostEstimate(
        flops=2 * B * in_dim,
        transcendentals=B,
        bytes_accessed=B * in_dim * x.dtype.itemsize + B * 4,
    )

    out = pl.pallas_call(
        _net_kernel,
        out_shape=jax.ShapeDtypeStruct((1, B), jnp.float32),
        grid=grid,
        in_specs=[
            pl.BlockSpec((tm, in_dim), lambda i: (i, 0)),   # x tile, native (B, in_dim)
            pl.BlockSpec((8, in_dim), lambda i: (0, 0)),    # folded weights, VMEM-resident
            pl.BlockSpec((1, 1), lambda i: (0, 0)),         # folded bias,   VMEM-resident
        ],
        out_specs=pl.BlockSpec((1, tm), lambda i: (0, i)),  # lane-dense output row
        compiler_params=pltpu.CompilerParams(
            dimension_semantics=("parallel",)),             # megacore on v7x; no-op v5e/v6e
        cost_estimate=cost,
    )(x, w_pad, b2)

    # torch: .view(-1)
    return out[0]


def init_params(key, in_dim):
    dims = [in_dim, 32, 64, 32, 16, 8, 1]
    params = []
    for i in range(len(dims) - 1):
        fan_in, fan_out = dims[i], dims[i + 1]
        key, kw, kb = jax.random.split(key, 3)
        # PyTorch nn.Linear default init: U(-1/sqrt(fan_in), 1/sqrt(fan_in)), W is (out, in).
        bound = 1.0 / jnp.sqrt(fan_in)
        w = jax.random.uniform(kw, (fan_out, fan_in), jnp.float32, -bound, bound)
        b = jax.random.uniform(kb, (fan_out,), jnp.float32, -bound, bound)
        params.append((w, b))
    return params


if __name__ == "__main__":
    key = jax.random.PRNGKey(0)
    in_dim = 16
    batch = 8

    kx, kp = jax.random.split(key)
    x = jax.random.normal(kx, (batch, in_dim), jnp.float32)
    params = init_params(kp, in_dim)

    y = net_forward(x, params)
    jax.block_until_ready(y)

    # Reference in plain JAX, layer by layer (PyTorch semantics: h = h @ W.T + b).
    ref = x.astype(jnp.float32)
    for w, b in params:
        ref = ref @ w.T + b
    ref = jax.nn.sigmoid(ref).reshape(-1)

    assert y.shape == (batch,)
    assert jnp.allclose(y, ref, atol=2e-5, rtol=2e-5)

    print("KERNEL_OK")
</pallas_src>

<mosaic_0001>
module attributes {stable_mosaic.version = 11 : i64} {
  func.func @_net_kernel(%arg0: i32, %arg1: memref<8x16xf32, #tpu.memory_space<vmem>>, %arg2: memref<8x16xf32, #tpu.memory_space<vmem>>, %arg3: memref<1x1xf32, #tpu.memory_space<vmem>>, %arg4: memref<1x8xf32, #tpu.memory_space<vmem>>) attributes {dimension_semantics = [#tpu.dimension_semantics<parallel>], iteration_bounds = array<i64: 1>, scalar_prefetch = 0 : i64, scratch_operands = 0 : i64, tpu.core_type = #tpu.core_type<tc>, window_params = [{transform_indices = @transform_0, window_bounds = array<i64: 8, 16>}, {pipeline_mode = #tpu.pipeline_mode<synchronous>, transform_indices = @transform_1, window_bounds = array<i64: 8, 16>}, {pipeline_mode = #tpu.pipeline_mode<synchronous>, transform_indices = @transform_2, window_bounds = array<i64: 1, 1>}, {transform_indices = @transform_3, window_bounds = array<i64: 1, 8>}]} {
    %c0 = arith.constant 0 : index
    %c0_0 = arith.constant 0 : index
    %0 = vector.load %arg1[%c0, %c0_0] : memref<8x16xf32, #tpu.memory_space<vmem>>, vector<8x16xf32>
    %c0_1 = arith.constant 0 : index
    %c0_2 = arith.constant 0 : index
    %1 = vector.load %arg2[%c0_1, %c0_2] : memref<8x16xf32, #tpu.memory_space<vmem>>, vector<8x16xf32>
    %cst = arith.constant dense<0.000000e+00> : vector<8x8xf32>
    %2 = tpu.matmul %1, %0, %cst {dimension_numbers = #tpu.dot_dimension_numbers<[1], [1], [0], [0], [0, 0, 1, 0], [], []>} : vector<8x16xf32>, vector<8x16xf32>, vector<8x8xf32> -> vector<8x8xf32>
    %3 = vector.extract_strided_slice %2 {offsets = [0, 0], sizes = [1, 8], strides = [1, 1]} : vector<8x8xf32> to vector<1x8xf32>
    %c0_3 = arith.constant 0 : index
    %c0_4 = arith.constant 0 : index
    %4 = vector.load %arg3[%c0_3, %c0_4] : memref<1x1xf32, #tpu.memory_space<vmem>>, vector<1x1xf32>
    %5 = vector.broadcast %4 : vector<1x1xf32> to vector<1x8xf32>
    %6 = arith.addf %3, %5 : vector<1x8xf32>
    %7 = arith.negf %6 : vector<1x8xf32>
    %8 = math.exp %7 : vector<1x8xf32>
    %cst_5 = arith.constant 1.000000e+00 : f32
    %9 = vector.broadcast %cst_5 : f32 to vector<1x8xf32>
    %10 = arith.addf %9, %8 : vector<1x8xf32>
    %11 = arith.divf %9, %10 : vector<1x8xf32>
    %c0_6 = arith.constant 0 : index
    %c0_7 = arith.constant 0 : index
    %12 = vector.load %arg4[%c0_6, %c0_7] : memref<1x8xf32, #tpu.memory_space<vmem>>, vector<1x8xf32>
    tpu.vector_store %arg4[%c0_6, %c0_7], %11 {strides = array<i32>} : memref<1x8xf32, #tpu.memory_space<vmem>>, vector<1x8xf32>,
    return
  }
  func.func @transform_0(%arg0: i32) -> (i32, i32) {
    %c0_i32 = arith.constant 0 : i32
    %c0_i32_0 = arith.constant 0 : i32
    return %arg0, %c0_i32 : i32, i32
  }
  func.func @transform_1(%arg0: i32) -> (i32, i32) {
    %c0_i32 = arith.constant 0 : i32
    %c0_i32_0 = arith.constant 0 : i32
    %c0_i32_1 = arith.constant 0 : i32
    return %c0_i32, %c0_i32_0 : i32, i32
  }
  func.func @transform_2(%arg0: i32) -> (i32, i32) {
    %c0_i32 = arith.constant 0 : i32
    %c0_i32_0 = arith.constant 0 : i32
    %c0_i32_1 = arith.constant 0 : i32
    return %c0_i32, %c0_i32_0 : i32, i32
  }
  func.func @transform_3(%arg0: i32) -> (i32, i32) {
    %c0_i32 = arith.constant 0 : i32
    %c0_i32_0 = arith.constant 0 : i32
    return %c0_i32, %arg0 : i32, i32
  }
}

</mosaic_0001>

<llo_original>
// kernel: tpu_custom_call.1
$region0: #{tpu_custom_call.1}
  #allocation0 [shape = 'u32[]', space=smem, size = 0x4, offset = 0x4, fixed_abs, tag = 'smem constant byte address 0x4 - core index']
  #allocation1 [shape = 'u32[72,128]{1,0:T(1,128)}', space=vmem, size = 0x9000, scoped, tag = 'internal scratch']
  #allocation2 [shape = 'f32[1,1]{1,0:T(1,128)S(1)}', space=vmem, size = 0x200, scoped, tag = 'scoped memory for tpu_custom_call.1']
  %s0 = inlined_call_operand.hbm [shape: f32[8,16], index: 0, kind: input, shape index: {}]
  %s1 = inlined_call_operand.hbm [shape: f32[8,16], index: 1, kind: input, shape index: {}]
  %s2 = inlined_call_operand.<no memory space> [shape: f32[1,1], index: 2, kind: input, shape index: {}]
  %s3 = inlined_call_operand.hbm [shape: f32[1,8], index: 3, kind: output, shape index: {}]
  %s4 = sld [smem:[#allocation0]]
  $region30: #{tpu_custom_call.1} parent=0
    _
  %s6 = ssub.s32 1, %s4
  %s7 = scalar_select 0, %s6, %s4
  %v8 = vstv %s2
  %9 = vst [vmem:[#allocation2] sm:$0x1] %v8
  $region1: #{tpu_custom_call.1} parent=0
    #allocation3 [shape = 'u8[4096]{0}', space=vmem, size = 0x1000, scoped, tag = 'input window, operand 0, single buffered']
    #allocation4 [shape = 's32[1]{0}', space=sflag, size = 0x4, scoped, tag = 'scoped memory for tpu_custom_call.1']
    #allocation5 [shape = 's32[1]{0}', space=sflag, size = 0x4, scoped, tag = 'scoped memory for tpu_custom_call.1']
    #allocation6 [shape = 'u8[4096]{0}', space=vmem, size = 0x1000, scoped, tag = 'input window, operand 1, single buffered']
    #allocation7 [shape = 's32[1]{0}', space=sflag, size = 0x4, scoped, tag = 'scoped memory for tpu_custom_call.1']
    #allocation8 [shape = 'u8[512]{0}', space=vmem, size = 0x400, scoped, tag = 'output window, operand 0, single buffered']
    %10 = vsyncpa [#allocation4], 0
    %11 = vsyncpa [#allocation7], 0
    %12 = vsyncpa [#allocation5], 0
    // Predicated region
    $region2: #{tpu_custom_call.1} parent=1 // pred_check
      _
    $region3: #{tpu_custom_call.1} parent=1 // pred_check_branch
      %14 = sbr.rel (0) target = $region5
    $region4: #{tpu_custom_call.1} parent=1 // pred_region
      %16 = vsyncadd [#allocation4], 0
      %s18 = sshll.u32 %s0, 4
      %s19 = int_to_ptr.hbm [resolvable:$true] %s18
      %s20 = sshll.u32 [#allocation3], 4
      %s21 = int_to_ptr.vmem [resolvable:$true] %s20
      %23 = dma.hbm_to_vmem [thread:$0]  %s19, 128, %s21, [#allocation4]
    $region5: #{tpu_custom_call.1} parent=1 // pred_fallthru
      _
    // Predicated region
    $region6: #{tpu_custom_call.1} parent=1 // pred_check
      _
    $region7: #{tpu_custom_call.1} parent=1 // pred_check_branch
      %25 = sbr.rel (0) target = $region9
    $region8: #{tpu_custom_call.1} parent=1 // pred_region
      %27 = vsyncadd [#allocation7], 0
      %s29 = sshll.u32 %s1, 4
      %s30 = int_to_ptr.hbm [resolvable:$true] %s29
      %s31 = sshll.u32 [#allocation6], 4
      %s32 = int_to_ptr.vmem [resolvable:$true] %s31
      %34 = dma.hbm_to_vmem [thread:$0]  %s30, 128, %s32, [#allocation7]
    $region9: #{tpu_custom_call.1} parent=1 // pred_fallthru
      _
    // Predicated region
    $region10: #{tpu_custom_call.1} parent=1 // pred_check
      _
    $region11: #{tpu_custom_call.1} parent=1 // pred_check_branch
      %36 = sbr.rel (0) target = $region13
    $region12: #{tpu_custom_call.1} parent=1 // pred_region
      _
    $region13: #{tpu_custom_call.1} parent=1 // pred_fallthru
      _
    // Predicated region
    $region14: #{tpu_custom_call.1} parent=1 // pred_check
      _
    $region15: #{tpu_custom_call.1} parent=1 // pred_check_branch
      %38 = sbr.rel (0) target = $region17
    $region16: #{tpu_custom_call.1} parent=1 // pred_region
      %40 = dma.done [#allocation4], 128
    $region17: #{tpu_custom_call.1} parent=1 // pred_fallthru
      _
    // Predicated region
    $region18: #{tpu_custom_call.1} parent=1 // pred_check
      _
    $region19: #{tpu_custom_call.1} parent=1 // pred_check_branch
      %42 = sbr.rel (0) target = $region21
    $region20: #{tpu_custom_call.1} parent=1 // pred_region
      %44 = dma.done [#allocation7], 128
    $region21: #{tpu_custom_call.1} parent=1 // pred_fallthru
      _
    %v45 = vld [vmem:[#allocation3] sm:$0xff]
    %v46 = vld [vmem:[#allocation6] sm:$0xff]
    %vm47 = vcmask 130048
    %v49 = vsel %vm47, %v46, 0
    %v52 = vsel %vm47, %v45, 0
    %54 = vmatpush.xpose.msra.mxu0 0.0
    %55 = vmatpush.xpose.msra.mxu0 0.0
    %56 = vmatpush.xpose.msra.mxu0 0.0
    %57 = vmatpush.xpose.msra.mxu0 0.0
    %58 = vmatpush.xpose.msra.mxu0 0.0
    %59 = vmatpush.xpose.msra.mxu0 0.0
    %60 = vmatpush.xpose.msra.mxu0 0.0
    %61 = vmatpush.xpose.msra.mxu0 0.0
    %62 = vmatpush.xpose.msra.mxu0 0.0
    %63 = vmatpush.xpose.msra.mxu0 0.0
    %64 = vmatpush.xpose.msra.mxu0 0.0
    %65 = vmatpush.xpose.msra.mxu0 0.0
    %66 = vmatpush.xpose.msra.mxu0 0.0
    %67 = vmatpush.xpose.msra.mxu0 0.0
    %68 = vmatpush.xpose.msra.mxu0 0.0
    %69 = vmatpush.xpose.msra.mxu0 %v52
    %70 = vmatmul.f32.gmra.mxu0 %v49
    %v71 = vpop.f32.mrf.mxu0
    %v72 = vadd.f32 0.0, %v71
    %73 = vdwg.mxu0
    %v74 = vld [vmem:[#allocation2] sm:$0x1]
    %76 = vset.pattern.permute.xlu0 0
    %77 = vperm.xlu0 %76, %v74
    %v78 = vpop.permute.xlu0 %77
    %v80 = vperm.slane %v78, 0
    %v81 = vadd.f32 %v72, %v80
    %v82 = vxor.u32 %v81, 2147483648
    %v83 = vmul.f32 %v82, 1.442695
    %v84 = vpow.pop %v83
    %v85 = vadd.f32 %v84, 1.0
    %v86 = vrcp.pop %v85
    %v87 = vmul.f32 %v85, %v86
    %v88 = vsub.f32 1.0, %v87
    %v89 = vmul.f32 %v86, %v88
    %v90 = vadd.f32 %v86, %v89
    %vm91 = vweird.f32 %v85
    %vm92 = vweird.f32 %v86
    %vm93 = vmor %vm91, %vm92
    %v94 = vsel %vm93, %v86, %v90
    %v95 = vand.u32 2147483647, %v85
    %vm96 = vcmp.eq.f32.partialorder %v95, 8.507059e+37
    %v97 = vand.u32 %v85, 2147483648
    %v98 = vor.u32 1.1754944e-38, %v97
    %v99 = vsel %vm96, %v98, %v94
    %v100 = vmul.f32 1.0, %v99
    %vm101 = vcmask 57344
    %102 = vst.msk [vmem:[#allocation8] sm:$0x1] %vm101, %v100
    // Predicated region
    $region22: #{tpu_custom_call.1} parent=1 // pred_check
      _
    $region23: #{tpu_custom_call.1} parent=1 // pred_check_branch
      %104 = sbr.rel (0) target = $region25
    $region24: #{tpu_custom_call.1} parent=1 // pred_region
      %106 = vsyncadd [#allocation5], 0
      %s108 = sshll.u32 [#allocation8], 4
      %s109 = int_to_ptr.vmem [resolvable:$true] %s108
      %s110 = sshll.u32 %s3, 4
      %s111 = int_to_ptr.hbm [resolvable:$true] %s110
      %113 = dma.vmem_to_hbm [thread:$0]  %s109, 16, %s111, [#allocation5]
    $region25: #{tpu_custom_call.1} parent=1 // pred_fallthru
      _
    // Predicated region
    $region26: #{tpu_custom_call.1} parent=1 // pred_check
      _
    $region27: #{tpu_custom_call.1} parent=1 // pred_check_branch
      %115 = sbr.rel (0) target = $region29
    $region28: #{tpu_custom_call.1} parent=1 // pred_region
      %117 = dma.done [#allocation5], 16
    $region29: #{tpu_custom_call.1} parent=1 // pred_fallthru
      _
    %118 = vsyncpa [#allocation4], 1
    %119 = vsyncpa [#allocation7], 1
    %120 = vsyncpa [#allocation5], 1

</llo_original>
